<compile_context>
chip_gen: v5e
topology: v5e:2x2
jax: 0.10.0
libtpu: 0.0.40
codegen_flags: <defaults>
</compile_context>

<pallas_src>
import functools

import jax
import jax.numpy as jnp
from jax.experimental import pallas as pl
from jax.experimental.pallas import tpu as pltpu

MAX_TILE_B = 2048  # per-step batch tile in the large-B (multi-step) regime


def mlp_kernel(x_ref,
               w1_ref, b1_ref,
               w2_ref, b2_ref,
               w3_ref, b3_ref,
               w4_ref, b4_ref,
               w5_ref, b5_ref,
               o_ref):
    """Fused forward for one batch tile; activations are (features, batch)."""
    x = x_ref[...]                                                  # (1, TB) f32

    # Layer 1 (1 -> 256): K=1 contraction == outer product; do it on the VPU
    # as a broadcast multiply-add instead of a degenerate MXU pass.
    h = jnp.maximum(w1_ref[...] * x + b1_ref[...], 0.0)            # (256, TB) f32

    # Layers 2-4: real MXU matmuls, bf16 operands, f32 accumulate,
    # f32 bias + ReLU on the VPU (v5e has no bf16 VALU).
    h = jnp.dot(w2_ref[...], h.astype(w2_ref.dtype),
                preferred_element_type=jnp.float32)                 # (128, TB)
    h = jnp.maximum(h + b2_ref[...], 0.0)

    h = jnp.dot(w3_ref[...], h.astype(w3_ref.dtype),
                preferred_element_type=jnp.float32)                 # (128, TB)
    h = jnp.maximum(h + b3_ref[...], 0.0)

    h = jnp.dot(w4_ref[...], h.astype(w4_ref.dtype),
                preferred_element_type=jnp.float32)                 # (128, TB)
    h = jnp.maximum(h + b4_ref[...], 0.0)

    # Layer 5 (128 -> 1): N=1 matmul wastes the MXU; multiply (VPU) and
    # reduce over the feature/sublane axis (XLU) instead.
    y = jnp.sum(w5_ref[...] * h, axis=0, keepdims=True)             # (1, TB)
    o_ref[...] = (y + b5_ref[...]).astype(o_ref.dtype)


def _choose_tile_b(B):
    """Lane-align the batch and pick a tile so small batches use one grid step."""
    b_lane = -(-B // 128) * 128           # round up to a lane multiple (>= 128)
    return b_lane if b_lane <= MAX_TILE_B else MAX_TILE_B


def simple_model_forward(x, params, *, tile_b=None, matmul_dtype=jnp.bfloat16):
    """x: (B, 1) float32. params: dict of weights/biases. Returns (B, 1) f32."""
    B, F = x.shape
    assert F == 1

    if tile_b is None:
        tile_b = _choose_tile_b(B)

    # Lane-dense layout: (B, 1) -> (1, B) is a pure reshape (same data order).
    x_t = x.reshape(1, B)

    # Pad ragged batches to a multiple of tile_b; padded lanes are discarded.
    n_tiles = pl.cdiv(B, tile_b)
    B_pad = n_tiles * tile_b
    if B_pad != B:
        x_t = jnp.pad(x_t, ((0, 0), (0, B_pad - B)))

    w1, b1 = params["w1"], params["b1"]                        # (256,1), (256,1) f32
    w2, b2 = params["w2"].astype(matmul_dtype), params["b2"]   # (128,256), (128,1)
    w3, b3 = params["w3"].astype(matmul_dtype), params["b3"]   # (128,128), (128,1)
    w4, b4 = params["w4"].astype(matmul_dtype), params["b4"]   # (128,128), (128,1)
    w5, b5 = params["w5"], params["b5"]                        # (128,1), (1,1) f32

    kernel_consts = (w1, b1, w2, b2, w3, b3, w4, b4, w5, b5)

    def rep_spec(arr):
        # Full-array block, constant index -> resident in VMEM across the grid.
        return pl.BlockSpec(arr.shape, lambda i, nd=arr.ndim: (0,) * nd)

    flops = 2 * B_pad * (1 * 256 + 256 * 128 + 128 * 128 + 128 * 128 + 128 * 1)
    bytes_accessed = (
        x_t.size * x_t.dtype.itemsize
        + B_pad * 4
        + sum(a.size * a.dtype.itemsize for a in kernel_consts)
    )

    # Single-step grids gain nothing from megacore sharding (each core would
    # pay its own prologue + weight copies); keep "parallel" only when there
    # are multiple full-width (tile_b == MAX_TILE_B) steps to hand out.
    dim_sem = ("arbitrary",) if n_tiles == 1 else ("parallel",)

    y_t = pl.pallas_call(
        mlp_kernel,
        out_shape=jax.ShapeDtypeStruct((1, B_pad), jnp.float32),
        grid_spec=pltpu.PrefetchScalarGridSpec(
            num_scalar_prefetch=0,
            grid=(n_tiles,),
            in_specs=[
                pl.BlockSpec((1, tile_b), lambda i: (0, i)),   # x tile (lane-dense)
            ] + [rep_spec(a) for a in kernel_consts],
            out_specs=pl.BlockSpec((1, tile_b), lambda i: (0, i)),
        ),
        compiler_params=pltpu.CompilerParams(
            dimension_semantics=dim_sem,
            # v5e default scoped VMEM is 16 MiB; big tiles want a bit more.
            vmem_limit_bytes=32 * 1024 * 1024,
        ),
        cost_estimate=pl.CostEstimate(
            flops=flops, transcendentals=0, bytes_accessed=bytes_accessed),
    )(x_t, *kernel_consts)

    return y_t[:, :B].reshape(B, 1)


def init_params(key):
    """PyTorch-style U(-1/sqrt(fan_in), 1/sqrt(fan_in)) init for the 5 Linears.

    Weights are stored (out, in) like PyTorch, except w5 which is stored as a
    (in, 1) column (used in the lane-reduce last layer). Biases are (out, 1)
    columns so they broadcast over the batch/lane axis inside the kernel.
    """
    dims = [(1, 256), (256, 128), (128, 128), (128, 128), (128, 1)]
    params = {}
    keys = jax.random.split(key, 2 * len(dims))
    for idx, (fan_in, fan_out) in enumerate(dims):
        bound = 1.0 / jnp.sqrt(jnp.float32(fan_in))
        w_shape = (fan_in, fan_out) if idx == len(dims) - 1 else (fan_out, fan_in)
        w = jax.random.uniform(keys[2 * idx], w_shape,
                               minval=-bound, maxval=bound, dtype=jnp.float32)
        b = jax.random.uniform(keys[2 * idx + 1], (fan_out, 1),
                               minval=-bound, maxval=bound, dtype=jnp.float32)
        params[f"w{idx + 1}"] = w
        params[f"b{idx + 1}"] = b
    return params


def reference_forward_f32(x, params):
    """Pure-f32 JAX reference with the exact PyTorch forward semantics."""
    h = x.reshape(1, -1)                                        # (1, B)
    h = jnp.maximum(params["w1"] @ h + params["b1"], 0.0)
    for i in (2, 3, 4):
        h = jnp.maximum(params[f"w{i}"] @ h + params[f"b{i}"], 0.0)
    y = params["w5"].T @ h + params["b5"]
    return y.reshape(-1, 1)


def reference_forward_bf16(x, params, matmul_dtype=jnp.bfloat16):
    """JAX reference applying the same bf16-operand / f32-accumulate casts."""
    h = x.reshape(1, -1)
    h = jnp.maximum(params["w1"] * h + params["b1"], 0.0)
    for i in (2, 3, 4):
        w = params[f"w{i}"].astype(matmul_dtype)
        h = jnp.dot(w, h.astype(matmul_dtype),
                    preferred_element_type=jnp.float32)
        h = jnp.maximum(h + params[f"b{i}"], 0.0)
    y = jnp.sum(params["w5"] * h, axis=0, keepdims=True) + params["b5"]
    return y.reshape(-1, 1)


if __name__ == "__main__":
    key = jax.random.PRNGKey(0)
    pkey, xkey = jax.random.split(key)

    params = init_params(pkey)

    # Small batch: adaptive tiling -> single grid step (B padded to 128 lanes).
    B = 8
    x = jax.random.normal(xkey, (B, 1), dtype=jnp.float32)

    fwd = jax.jit(functools.partial(simple_model_forward))
    y = jax.block_until_ready(fwd(x, params))

    y_ref = reference_forward_bf16(x, params)   # same casts as the kernel
    y_f32 = reference_forward_f32(x, params)    # PyTorch-exact f32 semantics

    assert y.shape == (B, 1)
    assert jnp.allclose(y, y_ref, atol=1e-3, rtol=1e-3), "mismatch vs bf16 reference"
    assert jnp.allclose(y, y_f32, atol=1e-1, rtol=1e-1), "mismatch vs f32 reference"

    # Ragged batch + forced multi-step grid (exercises the tiled/parallel path
    # cheaply with a small explicit tile_b override).
    B2 = 300
    x2 = jax.random.normal(jax.random.PRNGKey(1), (B2, 1), dtype=jnp.float32)
    fwd_tiled = jax.jit(functools.partial(simple_model_forward, tile_b=128))
    y2 = jax.block_until_ready(fwd_tiled(x2, params))
    y2_ref = reference_forward_bf16(x2, params)
    assert y2.shape == (B2, 1)
    assert jnp.allclose(y2, y2_ref, atol=1e-3, rtol=1e-3), "ragged-batch mismatch"

    print("KERNEL_OK")
</pallas_src>

<mosaic_0001>
module attributes {stable_mosaic.version = 11 : i64} {
  func.func @mlp_kernel(%arg0: i32, %arg1: memref<1x128xf32, #tpu.memory_space<vmem>>, %arg2: memref<256x1xf32, #tpu.memory_space<vmem>>, %arg3: memref<256x1xf32, #tpu.memory_space<vmem>>, %arg4: memref<128x256xbf16, #tpu.memory_space<vmem>>, %arg5: memref<128x1xf32, #tpu.memory_space<vmem>>, %arg6: memref<128x128xbf16, #tpu.memory_space<vmem>>, %arg7: memref<128x1xf32, #tpu.memory_space<vmem>>, %arg8: memref<128x128xbf16, #tpu.memory_space<vmem>>, %arg9: memref<128x1xf32, #tpu.memory_space<vmem>>, %arg10: memref<128x1xf32, #tpu.memory_space<vmem>>, %arg11: memref<1x1xf32, #tpu.memory_space<vmem>>, %arg12: memref<1x128xf32, #tpu.memory_space<vmem>>) attributes {dimension_semantics = [#tpu.dimension_semantics<arbitrary>], iteration_bounds = array<i64: 1>, scalar_prefetch = 0 : i64, scratch_operands = 0 : i64, tpu.core_type = #tpu.core_type<tc>, window_params = [{transform_indices = @transform_0, window_bounds = array<i64: 1, 128>}, {pipeline_mode = #tpu.pipeline_mode<synchronous>, transform_indices = @transform_1, window_bounds = array<i64: 256, 1>}, {pipeline_mode = #tpu.pipeline_mode<synchronous>, transform_indices = @transform_2, window_bounds = array<i64: 256, 1>}, {pipeline_mode = #tpu.pipeline_mode<synchronous>, transform_indices = @transform_3, window_bounds = array<i64: 128, 256>}, {pipeline_mode = #tpu.pipeline_mode<synchronous>, transform_indices = @transform_4, window_bounds = array<i64: 128, 1>}, {pipeline_mode = #tpu.pipeline_mode<synchronous>, transform_indices = @transform_5, window_bounds = array<i64: 128, 128>}, {pipeline_mode = #tpu.pipeline_mode<synchronous>, transform_indices = @transform_6, window_bounds = array<i64: 128, 1>}, {pipeline_mode = #tpu.pipeline_mode<synchronous>, transform_indices = @transform_7, window_bounds = array<i64: 128, 128>}, {pipeline_mode = #tpu.pipeline_mode<synchronous>, transform_indices = @transform_8, window_bounds = array<i64: 128, 1>}, {pipeline_mode = #tpu.pipeline_mode<synchronous>, transform_indices = @transform_9, window_bounds = array<i64: 128, 1>}, {pipeline_mode = #tpu.pipeline_mode<synchronous>, transform_indices = @transform_10, window_bounds = array<i64: 1, 1>}, {transform_indices = @transform_11, window_bounds = array<i64: 1, 128>}]} {
    %c0 = arith.constant 0 : index
    %c0_0 = arith.constant 0 : index
    %0 = vector.load %arg1[%c0, %c0_0] : memref<1x128xf32, #tpu.memory_space<vmem>>, vector<1x128xf32>
    %c0_1 = arith.constant 0 : index
    %c0_2 = arith.constant 0 : index
    %1 = vector.load %arg2[%c0_1, %c0_2] : memref<256x1xf32, #tpu.memory_space<vmem>>, vector<256x1xf32>
    %2 = vector.broadcast %1 : vector<256x1xf32> to vector<256x128xf32>
    %3 = vector.broadcast %0 : vector<1x128xf32> to vector<256x128xf32>
    %4 = arith.mulf %2, %3 : vector<256x128xf32>
    %c0_3 = arith.constant 0 : index
    %c0_4 = arith.constant 0 : index
    %5 = vector.load %arg3[%c0_3, %c0_4] : memref<256x1xf32, #tpu.memory_space<vmem>>, vector<256x1xf32>
    %6 = vector.broadcast %5 : vector<256x1xf32> to vector<256x128xf32>
    %7 = arith.addf %4, %6 : vector<256x128xf32>
    %cst = arith.constant 0.000000e+00 : f32
    %8 = vector.broadcast %cst : f32 to vector<256x128xf32>
    %9 = arith.maximumf %7, %8 : vector<256x128xf32>
    %c0_5 = arith.constant 0 : index
    %c0_6 = arith.constant 0 : index
    %10 = vector.load %arg4[%c0_5, %c0_6] : memref<128x256xbf16, #tpu.memory_space<vmem>>, vector<128x256xbf16>
    %11 = arith.truncf %9 : vector<256x128xf32> to vector<256x128xbf16>
    %cst_7 = arith.constant dense<0.000000e+00> : vector<128x128xf32>
    %12 = tpu.matmul %10, %11, %cst_7 {dimension_numbers = #tpu.dot_dimension_numbers<[1], [0], [0], [1], [0, 0, 1, 1], [], []>} : vector<128x256xbf16>, vector<256x128xbf16>, vector<128x128xf32> -> vector<128x128xf32>
    %c0_8 = arith.constant 0 : index
    %c0_9 = arith.constant 0 : index
    %13 = vector.load %arg5[%c0_8, %c0_9] : memref<128x1xf32, #tpu.memory_space<vmem>>, vector<128x1xf32>
    %14 = vector.broadcast %13 : vector<128x1xf32> to vector<128x128xf32>
    %15 = arith.addf %12, %14 : vector<128x128xf32>
    %cst_10 = arith.constant 0.000000e+00 : f32
    %16 = vector.broadcast %cst_10 : f32 to vector<128x128xf32>
    %17 = arith.maximumf %15, %16 : vector<128x128xf32>
    %c0_11 = arith.constant 0 : index
    %c0_12 = arith.constant 0 : index
    %18 = vector.load %arg6[%c0_11, %c0_12] : memref<128x128xbf16, #tpu.memory_space<vmem>>, vector<128x128xbf16>
    %19 = arith.truncf %17 : vector<128x128xf32> to vector<128x128xbf16>
    %cst_13 = arith.constant dense<0.000000e+00> : vector<128x128xf32>
    %20 = tpu.matmul %18, %19, %cst_13 {dimension_numbers = #tpu.dot_dimension_numbers<[1], [0], [0], [1], [0, 0, 1, 1], [], []>} : vector<128x128xbf16>, vector<128x128xbf16>, vector<128x128xf32> -> vector<128x128xf32>
    %c0_14 = arith.constant 0 : index
    %c0_15 = arith.constant 0 : index
    %21 = vector.load %arg7[%c0_14, %c0_15] : memref<128x1xf32, #tpu.memory_space<vmem>>, vector<128x1xf32>
    %22 = vector.broadcast %21 : vector<128x1xf32> to vector<128x128xf32>
    %23 = arith.addf %20, %22 : vector<128x128xf32>
    %cst_16 = arith.constant 0.000000e+00 : f32
    %24 = vector.broadcast %cst_16 : f32 to vector<128x128xf32>
    %25 = arith.maximumf %23, %24 : vector<128x128xf32>
    %c0_17 = arith.constant 0 : index
    %c0_18 = arith.constant 0 : index
    %26 = vector.load %arg8[%c0_17, %c0_18] : memref<128x128xbf16, #tpu.memory_space<vmem>>, vector<128x128xbf16>
    %27 = arith.truncf %25 : vector<128x128xf32> to vector<128x128xbf16>
    %cst_19 = arith.constant dense<0.000000e+00> : vector<128x128xf32>
    %28 = tpu.matmul %26, %27, %cst_19 {dimension_numbers = #tpu.dot_dimension_numbers<[1], [0], [0], [1], [0, 0, 1, 1], [], []>} : vector<128x128xbf16>, vector<128x128xbf16>, vector<128x128xf32> -> vector<128x128xf32>
    %c0_20 = arith.constant 0 : index
    %c0_21 = arith.constant 0 : index
    %29 = vector.load %arg9[%c0_20, %c0_21] : memref<128x1xf32, #tpu.memory_space<vmem>>, vector<128x1xf32>
    %30 = vector.broadcast %29 : vector<128x1xf32> to vector<128x128xf32>
    %31 = arith.addf %28, %30 : vector<128x128xf32>
    %cst_22 = arith.constant 0.000000e+00 : f32
    %32 = vector.broadcast %cst_22 : f32 to vector<128x128xf32>
    %33 = arith.maximumf %31, %32 : vector<128x128xf32>
    %c0_23 = arith.constant 0 : index
    %c0_24 = arith.constant 0 : index
    %34 = vector.load %arg10[%c0_23, %c0_24] : memref<128x1xf32, #tpu.memory_space<vmem>>, vector<128x1xf32>
    %35 = vector.broadcast %34 : vector<128x1xf32> to vector<128x128xf32>
    %36 = arith.mulf %35, %33 : vector<128x128xf32>
    %cst_25 = arith.constant dense<0.000000e+00> : vector<128xf32>
    %37 = vector.multi_reduction <add>, %36, %cst_25 [0] : vector<128x128xf32> to vector<128xf32>
    %38 = vector.shape_cast %37 : vector<128xf32> to vector<1x128xf32>
    %c0_26 = arith.constant 0 : index
    %c0_27 = arith.constant 0 : index
    %39 = vector.load %arg11[%c0_26, %c0_27] : memref<1x1xf32, #tpu.memory_space<vmem>>, vector<1x1xf32>
    %40 = vector.broadcast %39 : vector<1x1xf32> to vector<1x128xf32>
    %41 = arith.addf %38, %40 : vector<1x128xf32>
    %c0_28 = arith.constant 0 : index
    %c0_29 = arith.constant 0 : index
    %42 = vector.load %arg12[%c0_28, %c0_29] : memref<1x128xf32, #tpu.memory_space<vmem>>, vector<1x128xf32>
    tpu.vector_store %arg12[%c0_28, %c0_29], %41 {strides = array<i32>} : memref<1x128xf32, #tpu.memory_space<vmem>>, vector<1x128xf32>,
    return
  }
  func.func @transform_0(%arg0: i32) -> (i32, i32) {
    %c0_i32 = arith.constant 0 : i32
    %c0_i32_0 = arith.constant 0 : i32
    return %c0_i32, %arg0 : i32, i32
  }
  func.func @transform_1(%arg0: i32) -> (i32, i32) {
    %c0_i32 = arith.constant 0 : i32
    %c0_i32_0 = arith.constant 0 : i32
    %c0_i32_1 = arith.constant 0 : i32
    return %c0_i32, %c0_i32_0 : i32, i32
  }
  func.func @transform_2(%arg0: i32) -> (i32, i32) {
    %c0_i32 = arith.constant 0 : i32
    %c0_i32_0 = arith.constant 0 : i32
    %c0_i32_1 = arith.constant 0 : i32
    return %c0_i32, %c0_i32_0 : i32, i32
  }
  func.func @transform_3(%arg0: i32) -> (i32, i32) {
    %c0_i32 = arith.constant 0 : i32
    %c0_i32_0 = arith.constant 0 : i32
    %c0_i32_1 = arith.constant 0 : i32
    return %c0_i32, %c0_i32_0 : i32, i32
  }
  func.func @transform_4(%arg0: i32) -> (i32, i32) {
    %c0_i32 = arith.constant 0 : i32
    %c0_i32_0 = arith.constant 0 : i32
    %c0_i32_1 = arith.constant 0 : i32
    return %c0_i32, %c0_i32_0 : i32, i32
  }
  func.func @transform_5(%arg0: i32) -> (i32, i32) {
    %c0_i32 = arith.constant 0 : i32
    %c0_i32_0 = arith.constant 0 : i32
    %c0_i32_1 = arith.constant 0 : i32
    return %c0_i32, %c0_i32_0 : i32, i32
  }
  func.func @transform_6(%arg0: i32) -> (i32, i32) {
    %c0_i32 = arith.constant 0 : i32
    %c0_i32_0 = arith.constant 0 : i32
    %c0_i32_1 = arith.constant 0 : i32
    return %c0_i32, %c0_i32_0 : i32, i32
  }
  func.func @transform_7(%arg0: i32) -> (i32, i32) {
    %c0_i32 = arith.constant 0 : i32
    %c0_i32_0 = arith.constant 0 : i32
    %c0_i32_1 = arith.constant 0 : i32
    return %c0_i32, %c0_i32_0 : i32, i32
  }
  func.func @transform_8(%arg0: i32) -> (i32, i32) {
    %c0_i32 = arith.constant 0 : i32
    %c0_i32_0 = arith.constant 0 : i32
    %c0_i32_1 = arith.constant 0 : i32
    return %c0_i32, %c0_i32_0 : i32, i32
  }
  func.func @transform_9(%arg0: i32) -> (i32, i32) {
    %c0_i32 = arith.constant 0 : i32
    %c0_i32_0 = arith.constant 0 : i32
    %c0_i32_1 = arith.constant 0 : i32
    return %c0_i32, %c0_i32_0 : i32, i32
  }
  func.func @transform_10(%arg0: i32) -> (i32, i32) {
    %c0_i32 = arith.constant 0 : i32
    %c0_i32_0 = arith.constant 0 : i32
    %c0_i32_1 = arith.constant 0 : i32
    return %c0_i32, %c0_i32_0 : i32, i32
  }
  func.func @transform_11(%arg0: i32) -> (i32, i32) {
    %c0_i32 = arith.constant 0 : i32
    %c0_i32_0 = arith.constant 0 : i32
    return %c0_i32, %arg0 : i32, i32
  }
}

</mosaic_0001>

<llo_original>
// kernel: simple_model_forward.1
$region0: #{simple_model_forward.1}
  #allocation0 [shape = 'u32[]', space=smem, size = 0x4, offset = 0x4, fixed_abs, tag = 'smem constant byte address 0x4 - core index']
  #allocation1 [shape = 'u32[72,128]{1,0:T(1,128)}', space=vmem, size = 0x9000, scoped, tag = 'internal scratch']
  #allocation2 [shape = 'f32[1,1]{1,0:T(1,128)S(1)}', space=vmem, size = 0x200, scoped, tag = 'scoped memory for simple_model_forward.1']
  %s0 = inlined_call_operand.vmem [shape: f32[1,128], index: 0, kind: input, shape index: {}]
  %s1 = inlined_call_operand.vmem [shape: f32[256,1], index: 1, kind: input, shape index: {}]
  %s2 = inlined_call_operand.vmem [shape: f32[256,1], index: 2, kind: input, shape index: {}]
  %s3 = inlined_call_operand.vmem [shape: bf16[128,256], index: 3, kind: input, shape index: {}]
  %s4 = inlined_call_operand.vmem [shape: f32[128,1], index: 4, kind: input, shape index: {}]
  %s5 = inlined_call_operand.vmem [shape: bf16[128,128], index: 5, kind: input, shape index: {}]
  %s6 = inlined_call_operand.vmem [shape: f32[128,1], index: 6, kind: input, shape index: {}]
  %s7 = inlined_call_operand.vmem [shape: bf16[128,128], index: 7, kind: input, shape index: {}]
  %s8 = inlined_call_operand.vmem [shape: f32[128,1], index: 8, kind: input, shape index: {}]
  %s9 = inlined_call_operand.vmem [shape: f32[128,1], index: 9, kind: input, shape index: {}]
  %s10 = inlined_call_operand.<no memory space> [shape: f32[1,1], index: 10, kind: input, shape index: {}]
  %s11 = inlined_call_operand.vmem [shape: f32[1,128], index: 11, kind: output, shape index: {}]
  %s12 = sld [smem:[#allocation0]]
  $region54: #{simple_model_forward.1} parent=0
    _
  %s14 = ssub.s32 1, %s12
  %s15 = scalar_select 0, %s14, %s12
  %v16 = vstv %s10
  %17 = vst [vmem:[#allocation2] sm:$0x1] %v16
  // Predicated region
  $region2: #{simple_model_forward.1} parent=0 // pred_check
    _
  $region3: #{simple_model_forward.1} parent=0 // pred_check_branch
    %19 = sbr.rel (0) target = $region5
  $region4: #{simple_model_forward.1} parent=0 // pred_region
    _
  $region5: #{simple_model_forward.1} parent=0 // pred_fallthru
    _
  // Predicated region
  $region6: #{simple_model_forward.1} parent=0 // pred_check
    _
  $region7: #{simple_model_forward.1} parent=0 // pred_check_branch
    %21 = sbr.rel (0) target = $region9
  $region8: #{simple_model_forward.1} parent=0 // pred_region
    _
  $region9: #{simple_model_forward.1} parent=0 // pred_fallthru
    _
  // Predicated region
  $region10: #{simple_model_forward.1} parent=0 // pred_check
    _
  $region11: #{simple_model_forward.1} parent=0 // pred_check_branch
    %23 = sbr.rel (0) target = $region13
  $region12: #{simple_model_forward.1} parent=0 // pred_region
    _
  $region13: #{simple_model_forward.1} parent=0 // pred_fallthru
    _
  // Predicated region
  $region14: #{simple_model_forward.1} parent=0 // pred_check
    _
  $region15: #{simple_model_forward.1} parent=0 // pred_check_branch
    %25 = sbr.rel (0) target = $region17
  $region16: #{simple_model_forward.1} parent=0 // pred_region
    _
  $region17: #{simple_model_forward.1} parent=0 // pred_fallthru
    _
  // Predicated region
  $region18: #{simple_model_forward.1} parent=0 // pred_check
    _
  $region19: #{simple_model_forward.1} parent=0 // pred_check_branch
    %27 = sbr.rel (0) target = $region21
  $region20: #{simple_model_forward.1} parent=0 // pred_region
    _
  $region21: #{simple_model_forward.1} parent=0 // pred_fallthru
    _
  // Predicated region
  $region22: #{simple_model_forward.1} parent=0 // pred_check
    _
  $region23: #{simple_model_forward.1} parent=0 // pred_check_branch
    %29 = sbr.rel (0) target = $region25
  $region24: #{simple_model_forward.1} parent=0 // pred_region
    _
  $region25: #{simple_model_forward.1} parent=0 // pred_fallthru
    _
  // Predicated region
  $region26: #{simple_model_forward.1} parent=0 // pred_check
    _
  $region27: #{simple_model_forward.1} parent=0 // pred_check_branch
    %31 = sbr.rel (0) target = $region29
  $region28: #{simple_model_forward.1} parent=0 // pred_region
    _
  $region29: #{simple_model_forward.1} parent=0 // pred_fallthru
    _
  // Predicated region
  $region30: #{simple_model_forward.1} parent=0 // pred_check
    _
  $region31: #{simple_model_forward.1} parent=0 // pred_check_branch
    %33 = sbr.rel (0) target = $region33
  $region32: #{simple_model_forward.1} parent=0 // pred_region
    _
  $region33: #{simple_model_forward.1} parent=0 // pred_fallthru
    _
  // Predicated region
  $region34: #{simple_model_forward.1} parent=0 // pred_check
    _
  $region35: #{simple_model_forward.1} parent=0 // pred_check_branch
    %35 = sbr.rel (0) target = $region37
  $region36: #{simple_model_forward.1} parent=0 // pred_region
    _
  $region37: #{simple_model_forward.1} parent=0 // pred_fallthru
    _
  // Predicated region
  $region38: #{simple_model_forward.1} parent=0 // pred_check
    _
  $region39: #{simple_model_forward.1} parent=0 // pred_check_branch
    %37 = sbr.rel (0) target = $region41
  $region40: #{simple_model_forward.1} parent=0 // pred_region
    _
  $region41: #{simple_model_forward.1} parent=0 // pred_fallthru
    _
  // Predicated region
  $region42: #{simple_model_forward.1} parent=0 // pred_check
    _
  $region43: #{simple_model_forward.1} parent=0 // pred_check_branch
    %39 = sbr.rel (0) target = $region45
  $region44: #{simple_model_forward.1} parent=0 // pred_region
    _
  $region45: #{simple_model_forward.1} parent=0 // pred_fallthru
    _
  %v40 = vld [vmem:[%s0] sm:$0x1]
  %v41 = vld [vmem:[%s1] sm:$0xff]
  %v42 = vld [vmem:[%s1 + $0x8] sm:$0xff]
  %v43 = vld [vmem:[%s1 + $0x10] sm:$0xff]
  %v44 = vld [vmem:[%s1 + $0x18] sm:$0xff]
  %v45 = vld [vmem:[%s1 + $0x20] sm:$0xff]
  %v46 = vld [vmem:[%s1 + $0x28] sm:$0xff]
  %v47 = vld [vmem:[%s1 + $0x30] sm:$0xff]
  %v48 = vld [vmem:[%s1 + $0x38] sm:$0xff]
  %v49 = vld [vmem:[%s1 + $0x40] sm:$0xff]
  %v50 = vld [vmem:[%s1 + $0x48] sm:$0xff]
  %v51 = vld [vmem:[%s1 + $0x50] sm:$0xff]
  %v52 = vld [vmem:[%s1 + $0x58] sm:$0xff]
  %v53 = vld [vmem:[%s1 + $0x60] sm:$0xff]
  %v54 = vld [vmem:[%s1 + $0x68] sm:$0xff]
  %v55 = vld [vmem:[%s1 + $0x70] sm:$0xff]
  %v56 = vld [vmem:[%s1 + $0x78] sm:$0xff]
  %v57 = vld [vmem:[%s1 + $0x80] sm:$0xff]
  %v58 = vld [vmem:[%s1 + $0x88] sm:$0xff]
  %v59 = vld [vmem:[%s1 + $0x90] sm:$0xff]
  %v60 = vld [vmem:[%s1 + $0x98] sm:$0xff]
  %v61 = vld [vmem:[%s1 + $0xa0] sm:$0xff]
  %v62 = vld [vmem:[%s1 + $0xa8] sm:$0xff]
  %v63 = vld [vmem:[%s1 + $0xb0] sm:$0xff]
  %v64 = vld [vmem:[%s1 + $0xb8] sm:$0xff]
  %v65 = vld [vmem:[%s1 + $0xc0] sm:$0xff]
  %v66 = vld [vmem:[%s1 + $0xc8] sm:$0xff]
  %v67 = vld [vmem:[%s1 + $0xd0] sm:$0xff]
  %v68 = vld [vmem:[%s1 + $0xd8] sm:$0xff]
  %v69 = vld [vmem:[%s1 + $0xe0] sm:$0xff]
  %v70 = vld [vmem:[%s1 + $0xe8] sm:$0xff]
  %v71 = vld [vmem:[%s1 + $0xf0] sm:$0xff]
  %v72 = vld [vmem:[%s1 + $0xf8] sm:$0xff]
  %74 = vset.pattern.permute.xlu0 0
  %75 = vperm.xlu0 %74, %v41
  %v76 = vpop.permute.xlu0 %75
  %79 = vset.pattern.permute.xlu0 0
  %80 = vperm.xlu0 %79, %v42
  %v81 = vpop.permute.xlu0 %80
  %84 = vset.pattern.permute.xlu0 0
  %85 = vperm.xlu0 %84, %v43
  %v86 = vpop.permute.xlu0 %85
  %89 = vset.pattern.permute.xlu0 0
  %90 = vperm.xlu0 %89, %v44
  %v91 = vpop.permute.xlu0 %90
  %94 = vset.pattern.permute.xlu0 0
  %95 = vperm.xlu0 %94, %v45
  %v96 = vpop.permute.xlu0 %95
  %99 = vset.pattern.permute.xlu0 0
  %100 = vperm.xlu0 %99, %v46
  %v101 = vpop.permute.xlu0 %100
  %104 = vset.pattern.permute.xlu0 0
  %105 = vperm.xlu0 %104, %v47
  %v106 = vpop.permute.xlu0 %105
  %109 = vset.pattern.permute.xlu0 0
  %110 = vperm.xlu0 %109, %v48
  %v111 = vpop.permute.xlu0 %110
  %114 = vset.pattern.permute.xlu0 0
  %115 = vperm.xlu0 %114, %v49
  %v116 = vpop.permute.xlu0 %115
  %119 = vset.pattern.permute.xlu0 0
  %120 = vperm.xlu0 %119, %v50
  %v121 = vpop.permute.xlu0 %120
  %124 = vset.pattern.permute.xlu0 0
  %125 = vperm.xlu0 %124, %v51
  %v126 = vpop.permute.xlu0 %125
  %129 = vset.pattern.permute.xlu0 0
  %130 = vperm.xlu0 %129, %v52
  %v131 = vpop.permute.xlu0 %130
  %134 = vset.pattern.permute.xlu0 0
  %135 = vperm.xlu0 %134, %v53
  %v136 = vpop.permute.xlu0 %135
  %139 = vset.pattern.permute.xlu0 0
  %140 = vperm.xlu0 %139, %v54
  %v141 = vpop.permute.xlu0 %140
  %144 = vset.pattern.permute.xlu0 0
  %145 = vperm.xlu0 %144, %v55
  %v146 = vpop.permute.xlu0 %145
  %149 = vset.pattern.permute.xlu0 0
  %150 = vperm.xlu0 %149, %v56
  %v151 = vpop.permute.xlu0 %150
  %154 = vset.pattern.permute.xlu0 0
  %155 = vperm.xlu0 %154, %v57
  %v156 = vpop.permute.xlu0 %155
  %159 = vset.pattern.permute.xlu0 0
  %160 = vperm.xlu0 %159, %v58
  %v161 = vpop.permute.xlu0 %160
  %164 = vset.pattern.permute.xlu0 0
  %165 = vperm.xlu0 %164, %v59
  %v166 = vpop.permute.xlu0 %165
  %169 = vset.pattern.permute.xlu0 0
  %170 = vperm.xlu0 %169, %v60
  %v171 = vpop.permute.xlu0 %170
  %174 = vset.pattern.permute.xlu0 0
  %175 = vperm.xlu0 %174, %v61
  %v176 = vpop.permute.xlu0 %175
  %179 = vset.pattern.permute.xlu0 0
  %180 = vperm.xlu0 %179, %v62
  %v181 = vpop.permute.xlu0 %180
  %184 = vset.pattern.permute.xlu0 0
  %185 = vperm.xlu0 %184, %v63
  %v186 = vpop.permute.xlu0 %185
  %189 = vset.pattern.permute.xlu0 0
  %190 = vperm.xlu0 %189, %v64
  %v191 = vpop.permute.xlu0 %190
  %194 = vset.pattern.permute.xlu0 0
  %195 = vperm.xlu0 %194, %v65
  %v196 = vpop.permute.xlu0 %195
  %199 = vset.pattern.permute.xlu0 0
  %200 = vperm.xlu0 %199, %v66
  %v201 = vpop.permute.xlu0 %200
  %204 = vset.pattern.permute.xlu0 0
  %205 = vperm.xlu0 %204, %v67
  %v206 = vpop.permute.xlu0 %205
  %209 = vset.pattern.permute.xlu0 0
  %210 = vperm.xlu0 %209, %v68
  %v211 = vpop.permute.xlu0 %210
  %214 = vset.pattern.permute.xlu0 0
  %215 = vperm.xlu0 %214, %v69
  %v216 = vpop.permute.xlu0 %215
  %219 = vset.pattern.permute.xlu0 0
  %220 = vperm.xlu0 %219, %v70
  %v221 = vpop.permute.xlu0 %220
  %224 = vset.pattern.permute.xlu0 0
  %225 = vperm.xlu0 %224, %v71
  %v226 = vpop.permute.xlu0 %225
  %229 = vset.pattern.permute.xlu0 0
  %230 = vperm.xlu0 %229, %v72
  %v231 = vpop.permute.xlu0 %230
  %v234 = vperm.slane %v40, 0
  %v236 = vmul.f32 %v76, %v234
  %v237 = vmul.f32 %v81, %v234
  %v238 = vmul.f32 %v86, %v234
  %v239 = vmul.f32 %v91, %v234
  %v240 = vmul.f32 %v96, %v234
  %v241 = vmul.f32 %v101, %v234
  %v242 = vmul.f32 %v106, %v234
  %v243 = vmul.f32 %v111, %v234
  %v244 = vmul.f32 %v116, %v234
  %v245 = vmul.f32 %v121, %v234
  %v246 = vmul.f32 %v126, %v234
  %v247 = vmul.f32 %v131, %v234
  %v248 = vmul.f32 %v136, %v234
  %v249 = vmul.f32 %v141, %v234
  %v250 = vmul.f32 %v146, %v234
  %v251 = vmul.f32 %v151, %v234
  %v252 = vmul.f32 %v156, %v234
  %v253 = vmul.f32 %v161, %v234
  %v254 = vmul.f32 %v166, %v234
  %v255 = vmul.f32 %v171, %v234
  %v256 = vmul.f32 %v176, %v234
  %v257 = vmul.f32 %v181, %v234
  %v258 = vmul.f32 %v186, %v234
  %v259 = vmul.f32 %v191, %v234
  %v260 = vmul.f32 %v196, %v234
  %v261 = vmul.f32 %v201, %v234
  %v262 = vmul.f32 %v206, %v234
  %v263 = vmul.f32 %v211, %v234
  %v264 = vmul.f32 %v216, %v234
  %v265 = vmul.f32 %v221, %v234
  %v266 = vmul.f32 %v226, %v234
  %v267 = vmul.f32 %v231, %v234
  %v268 = vld [vmem:[%s2] sm:$0xff]
  %v269 = vld [vmem:[%s2 + $0x8] sm:$0xff]
  %v270 = vld [vmem:[%s2 + $0x10] sm:$0xff]
  %v271 = vld [vmem:[%s2 + $0x18] sm:$0xff]
  %v272 = vld [vmem:[%s2 + $0x20] sm:$0xff]
  %v273 = vld [vmem:[%s2 + $0x28] sm:$0xff]
  %v274 = vld [vmem:[%s2 + $0x30] sm:$0xff]
  %v275 = vld [vmem:[%s2 + $0x38] sm:$0xff]
  %v276 = vld [vmem:[%s2 + $0x40] sm:$0xff]
  %v277 = vld [vmem:[%s2 + $0x48] sm:$0xff]
  %v278 = vld [vmem:[%s2 + $0x50] sm:$0xff]
  %v279 = vld [vmem:[%s2 + $0x58] sm:$0xff]
  %v280 = vld [vmem:[%s2 + $0x60] sm:$0xff]
  %v281 = vld [vmem:[%s2 + $0x68] sm:$0xff]
  %v282 = vld [vmem:[%s2 + $0x70] sm:$0xff]
  %v283 = vld [vmem:[%s2 + $0x78] sm:$0xff]
  %v284 = vld [vmem:[%s2 + $0x80] sm:$0xff]
  %v285 = vld [vmem:[%s2 + $0x88] sm:$0xff]
  %v286 = vld [vmem:[%s2 + $0x90] sm:$0xff]
  %v287 = vld [vmem:[%s2 + $0x98] sm:$0xff]
  %v288 = vld [vmem:[%s2 + $0xa0] sm:$0xff]
  %v289 = vld [vmem:[%s2 + $0xa8] sm:$0xff]
  %v290 = vld [vmem:[%s2 + $0xb0] sm:$0xff]
  %v291 = vld [vmem:[%s2 + $0xb8] sm:$0xff]
  %v292 = vld [vmem:[%s2 + $0xc0] sm:$0xff]
  %v293 = vld [vmem:[%s2 + $0xc8] sm:$0xff]
  %v294 = vld [vmem:[%s2 + $0xd0] sm:$0xff]
  %v295 = vld [vmem:[%s2 + $0xd8] sm:$0xff]
  %v296 = vld [vmem:[%s2 + $0xe0] sm:$0xff]
  %v297 = vld [vmem:[%s2 + $0xe8] sm:$0xff]
  %v298 = vld [vmem:[%s2 + $0xf0] sm:$0xff]
  %v299 = vld [vmem:[%s2 + $0xf8] sm:$0xff]
  %301 = vset.pattern.permute.xlu0 0
  %302 = vperm.xlu0 %301, %v268
  %v303 = vpop.permute.xlu0 %302
  %306 = vset.pattern.permute.xlu0 0
  %307 = vperm.xlu0 %306, %v269
  %v308 = vpop.permute.xlu0 %307
  %311 = vset.pattern.permute.xlu0 0
  %312 = vperm.xlu0 %311, %v270
  %v313 = vpop.permute.xlu0 %312
  %316 = vset.pattern.permute.xlu0 0
  %317 = vperm.xlu0 %316, %v271
  %v318 = vpop.permute.xlu0 %317
  %321 = vset.pattern.permute.xlu0 0
  %322 = vperm.xlu0 %321, %v272
  %v323 = vpop.permute.xlu0 %322
  %326 = vset.pattern.permute.xlu0 0
  %327 = vperm.xlu0 %326, %v273
  %v328 = vpop.permute.xlu0 %327
  %331 = vset.pattern.permute.xlu0 0
  %332 = vperm.xlu0 %331, %v274
  %v333 = vpop.permute.xlu0 %332
  %336 = vset.pattern.permute.xlu0 0
  %337 = vperm.xlu0 %336, %v275
  %v338 = vpop.permute.xlu0 %337
  %341 = vset.pattern.permute.xlu0 0
  %342 = vperm.xlu0 %341, %v276
  %v343 = vpop.permute.xlu0 %342
  %346 = vset.pattern.permute.xlu0 0
  %347 = vperm.xlu0 %346, %v277
  %v348 = vpop.permute.xlu0 %347
  %351 = vset.pattern.permute.xlu0 0
  %352 = vperm.xlu0 %351, %v278
  %v353 = vpop.permute.xlu0 %352
  %356 = vset.pattern.permute.xlu0 0
  %357 = vperm.xlu0 %356, %v279
  %v358 = vpop.permute.xlu0 %357
  %361 = vset.pattern.permute.xlu0 0
  %362 = vperm.xlu0 %361, %v280
  %v363 = vpop.permute.xlu0 %362
  %366 = vset.pattern.permute.xlu0 0
  %367 = vperm.xlu0 %366, %v281
  %v368 = vpop.permute.xlu0 %367
  %371 = vset.pattern.permute.xlu0 0
  %372 = vperm.xlu0 %371, %v282
  %v373 = vpop.permute.xlu0 %372
  %376 = vset.pattern.permute.xlu0 0
  %377 = vperm.xlu0 %376, %v283
  %v378 = vpop.permute.xlu0 %377
  %381 = vset.pattern.permute.xlu0 0
  %382 = vperm.xlu0 %381, %v284
  %v383 = vpop.permute.xlu0 %382
  %386 = vset.pattern.permute.xlu0 0
  %387 = vperm.xlu0 %386, %v285
  %v388 = vpop.permute.xlu0 %387
  %391 = vset.pattern.permute.xlu0 0
  %392 = vperm.xlu0 %391, %v286
  %v393 = vpop.permute.xlu0 %392
  %396 = vset.pattern.permute.xlu0 0
  %397 = vperm.xlu0 %396, %v287
  %v398 = vpop.permute.xlu0 %397
  %401 = vset.pattern.permute.xlu0 0
  %402 = vperm.xlu0 %401, %v288
  %v403 = vpop.permute.xlu0 %402
  %406 = vset.pattern.permute.xlu0 0
  %407 = vperm.xlu0 %406, %v289
  %v408 = vpop.permute.xlu0 %407
  %411 = vset.pattern.permute.xlu0 0
  %412 = vperm.xlu0 %411, %v290
  %v413 = vpop.permute.xlu0 %412
  %416 = vset.pattern.permute.xlu0 0
  %417 = vperm.xlu0 %416, %v291
  %v418 = vpop.permute.xlu0 %417
  %421 = vset.pattern.permute.xlu0 0
  %422 = vperm.xlu0 %421, %v292
  %v423 = vpop.permute.xlu0 %422
  %426 = vset.pattern.permute.xlu0 0
  %427 = vperm.xlu0 %426, %v293
  %v428 = vpop.permute.xlu0 %427
  %431 = vset.pattern.permute.xlu0 0
  %432 = vperm.xlu0 %431, %v294
  %v433 = vpop.permute.xlu0 %432
  %436 = vset.pattern.permute.xlu0 0
  %437 = vperm.xlu0 %436, %v295
  %v438 = vpop.permute.xlu0 %437
  %441 = vset.pattern.permute.xlu0 0
  %442 = vperm.xlu0 %441, %v296
  %v443 = vpop.permute.xlu0 %442
  %446 = vset.pattern.permute.xlu0 0
  %447 = vperm.xlu0 %446, %v297
  %v448 = vpop.permute.xlu0 %447
  %451 = vset.pattern.permute.xlu0 0
  %452 = vperm.xlu0 %451, %v298
  %v453 = vpop.permute.xlu0 %452
  %456 = vset.pattern.permute.xlu0 0
  %457 = vperm.xlu0 %456, %v299
  %v458 = vpop.permute.xlu0 %457
  %v460 = vadd.f32 %v236, %v303
  %v461 = vadd.f32 %v237, %v308
  %v462 = vadd.f32 %v238, %v313
  %v463 = vadd.f32 %v239, %v318
  %v464 = vadd.f32 %v240, %v323
  %v465 = vadd.f32 %v241, %v328
  %v466 = vadd.f32 %v242, %v333
  %v467 = vadd.f32 %v243, %v338
  %v468 = vadd.f32 %v244, %v343
  %v469 = vadd.f32 %v245, %v348
  %v470 = vadd.f32 %v246, %v353
  %v471 = vadd.f32 %v247, %v358
  %v472 = vadd.f32 %v248, %v363
  %v473 = vadd.f32 %v249, %v368
  %v474 = vadd.f32 %v250, %v373
  %v475 = vadd.f32 %v251, %v378
  %v476 = vadd.f32 %v252, %v383
  %v477 = vadd.f32 %v253, %v388
  %v478 = vadd.f32 %v254, %v393
  %v479 = vadd.f32 %v255, %v398
  %v480 = vadd.f32 %v256, %v403
  %v481 = vadd.f32 %v257, %v408
  %v482 = vadd.f32 %v258, %v413
  %v483 = vadd.f32 %v259, %v418
  %v484 = vadd.f32 %v260, %v423
  %v485 = vadd.f32 %v261, %v428
  %v486 = vadd.f32 %v262, %v433
  %v487 = vadd.f32 %v263, %v438
  %v488 = vadd.f32 %v264, %v443
  %v489 = vadd.f32 %v265, %v448
  %v490 = vadd.f32 %v266, %v453
  %v491 = vadd.f32 %v267, %v458
  %v492 = vmax.f32 %v460, 0.0
  %v493 = vmax.f32 %v461, 0.0
  %v494 = vmax.f32 %v462, 0.0
  %v495 = vmax.f32 %v463, 0.0
  %v496 = vmax.f32 %v464, 0.0
  %v497 = vmax.f32 %v465, 0.0
  %v498 = vmax.f32 %v466, 0.0
  %v499 = vmax.f32 %v467, 0.0
  %v500 = vmax.f32 %v468, 0.0
  %v501 = vmax.f32 %v469, 0.0
  %v502 = vmax.f32 %v470, 0.0
  %v503 = vmax.f32 %v471, 0.0
  %v504 = vmax.f32 %v472, 0.0
  %v505 = vmax.f32 %v473, 0.0
  %v506 = vmax.f32 %v474, 0.0
  %v507 = vmax.f32 %v475, 0.0
  %v508 = vmax.f32 %v476, 0.0
  %v509 = vmax.f32 %v477, 0.0
  %v510 = vmax.f32 %v478, 0.0
  %v511 = vmax.f32 %v479, 0.0
  %v512 = vmax.f32 %v480, 0.0
  %v513 = vmax.f32 %v481, 0.0
  %v514 = vmax.f32 %v482, 0.0
  %v515 = vmax.f32 %v483, 0.0
  %v516 = vmax.f32 %v484, 0.0
  %v517 = vmax.f32 %v485, 0.0
  %v518 = vmax.f32 %v486, 0.0
  %v519 = vmax.f32 %v487, 0.0
  %v520 = vmax.f32 %v488, 0.0
  %v521 = vmax.f32 %v489, 0.0
  %v522 = vmax.f32 %v490, 0.0
  %v523 = vmax.f32 %v491, 0.0
  %v524 = vld [vmem:[%s3] sm:$0xff]
  %v525 = vld [vmem:[%s3 + $0x8] sm:$0xff]
  %v526 = vld [vmem:[%s3 + $0x10] sm:$0xff]
  %v527 = vld [vmem:[%s3 + $0x18] sm:$0xff]
  %v528 = vld [vmem:[%s3 + $0x20] sm:$0xff]
  %v529 = vld [vmem:[%s3 + $0x28] sm:$0xff]
  %v530 = vld [vmem:[%s3 + $0x30] sm:$0xff]
  %v531 = vld [vmem:[%s3 + $0x38] sm:$0xff]
  %v532 = vld [vmem:[%s3 + $0x40] sm:$0xff]
  %v533 = vld [vmem:[%s3 + $0x48] sm:$0xff]
  %v534 = vld [vmem:[%s3 + $0x50] sm:$0xff]
  %v535 = vld [vmem:[%s3 + $0x58] sm:$0xff]
  %v536 = vld [vmem:[%s3 + $0x60] sm:$0xff]
  %v537 = vld [vmem:[%s3 + $0x68] sm:$0xff]
  %v538 = vld [vmem:[%s3 + $0x70] sm:$0xff]
  %v539 = vld [vmem:[%s3 + $0x78] sm:$0xff]
  %v540 = vpack.c.bf16 %v493, %v492
  %v541 = vpack.c.bf16 %v495, %v494
  %v542 = vpack.c.bf16 %v497, %v496
  %v543 = vpack.c.bf16 %v499, %v498
  %v544 = vpack.c.bf16 %v501, %v500
  %v545 = vpack.c.bf16 %v503, %v502
  %v546 = vpack.c.bf16 %v505, %v504
  %v547 = vpack.c.bf16 %v507, %v506
  %v548 = vpack.c.bf16 %v509, %v508
  %v549 = vpack.c.bf16 %v511, %v510
  %v550 = vpack.c.bf16 %v513, %v512
  %v551 = vpack.c.bf16 %v515, %v514
  %v552 = vpack.c.bf16 %v517, %v516
  %v553 = vpack.c.bf16 %v519, %v518
  %v554 = vpack.c.bf16 %v521, %v520
  %v555 = vpack.c.bf16 %v523, %v522
  %v556 = vld [vmem:[%s4] sm:$0xff]
  %v557 = vld [vmem:[%s4 + $0x8] sm:$0xff]
  %v558 = vld [vmem:[%s4 + $0x10] sm:$0xff]
  %v559 = vld [vmem:[%s4 + $0x18] sm:$0xff]
  %v560 = vld [vmem:[%s4 + $0x20] sm:$0xff]
  %v561 = vld [vmem:[%s4 + $0x28] sm:$0xff]
  %v562 = vld [vmem:[%s4 + $0x30] sm:$0xff]
  %v563 = vld [vmem:[%s4 + $0x38] sm:$0xff]
  %v564 = vld [vmem:[%s4 + $0x40] sm:$0xff]
  %v565 = vld [vmem:[%s4 + $0x48] sm:$0xff]
  %v566 = vld [vmem:[%s4 + $0x50] sm:$0xff]
  %v567 = vld [vmem:[%s4 + $0x58] sm:$0xff]
  %v568 = vld [vmem:[%s4 + $0x60] sm:$0xff]
  %v569 = vld [vmem:[%s4 + $0x68] sm:$0xff]
  %v570 = vld [vmem:[%s4 + $0x70] sm:$0xff]
  %v571 = vld [vmem:[%s4 + $0x78] sm:$0xff]
  %573 = vset.pattern.permute.xlu0 0
  %574 = vperm.xlu0 %573, %v556
  %v575 = vpop.permute.xlu0 %574
  %578 = vset.pattern.permute.xlu0 0
  %579 = vperm.xlu0 %578, %v557
  %v580 = vpop.permute.xlu0 %579
  %583 = vset.pattern.permute.xlu0 0
  %584 = vperm.xlu0 %583, %v558
  %v585 = vpop.permute.xlu0 %584
  %588 = vset.pattern.permute.xlu0 0
  %589 = vperm.xlu0 %588, %v559
  %v590 = vpop.permute.xlu0 %589
  %593 = vset.pattern.permute.xlu0 0
  %594 = vperm.xlu0 %593, %v560
  %v595 = vpop.permute.xlu0 %594
  %598 = vset.pattern.permute.xlu0 0
  %599 = vperm.xlu0 %598, %v561
  %v600 = vpop.permute.xlu0 %599
  %603 = vset.pattern.permute.xlu0 0
  %604 = vperm.xlu0 %603, %v562
  %v605 = vpop.permute.xlu0 %604
  %608 = vset.pattern.permute.xlu0 0
  %609 = vperm.xlu0 %608, %v563
  %v610 = vpop.permute.xlu0 %609
  %613 = vset.pattern.permute.xlu0 0
  %614 = vperm.xlu0 %613, %v564
  %v615 = vpop.permute.xlu0 %614
  %618 = vset.pattern.permute.xlu0 0
  %619 = vperm.xlu0 %618, %v565
  %v620 = vpop.permute.xlu0 %619
  %623 = vset.pattern.permute.xlu0 0
  %624 = vperm.xlu0 %623, %v566
  %v625 = vpop.permute.xlu0 %624
  %628 = vset.pattern.permute.xlu0 0
  %629 = vperm.xlu0 %628, %v567
  %v630 = vpop.permute.xlu0 %629
  %633 = vset.pattern.permute.xlu0 0
  %634 = vperm.xlu0 %633, %v568
  %v635 = vpop.permute.xlu0 %634
  %638 = vset.pattern.permute.xlu0 0
  %639 = vperm.xlu0 %638, %v569
  %v640 = vpop.permute.xlu0 %639
  %643 = vset.pattern.permute.xlu0 0
  %644 = vperm.xlu0 %643, %v570
  %v645 = vpop.permute.xlu0 %644
  %648 = vset.pattern.permute.xlu0 0
  %649 = vperm.xlu0 %648, %v571
  %v650 = vpop.permute.xlu0 %649
  %v668 = vunpack.c.l.b16 %v524
  %v669 = vunpack.c.h.b16 %v524
  %v670 = vunpack.c.l.b16 %v525
  %v671 = vunpack.c.h.b16 %v525
  %v672 = vunpack.c.l.b16 %v526
  %v673 = vunpack.c.h.b16 %v526
  %v674 = vunpack.c.l.b16 %v527
  %v675 = vunpack.c.h.b16 %v527
  %v676 = vunpack.c.l.b16 %v528
  %v677 = vunpack.c.h.b16 %v528
  %v678 = vunpack.c.l.b16 %v529
  %v679 = vunpack.c.h.b16 %v529
  %v680 = vunpack.c.l.b16 %v530
  %v681 = vunpack.c.h.b16 %v530
  %v682 = vunpack.c.l.b16 %v531
  %v683 = vunpack.c.h.b16 %v531
  %v684 = vunpack.c.l.b16 %v532
  %v685 = vunpack.c.h.b16 %v532
  %v686 = vunpack.c.l.b16 %v533
  %v687 = vunpack.c.h.b16 %v533
  %v688 = vunpack.c.l.b16 %v534
  %v689 = vunpack.c.h.b16 %v534
  %v690 = vunpack.c.l.b16 %v535
  %v691 = vunpack.c.h.b16 %v535
  %v692 = vunpack.c.l.b16 %v536
  %v693 = vunpack.c.h.b16 %v536
  %v694 = vunpack.c.l.b16 %v537
  %v695 = vunpack.c.h.b16 %v537
  %v696 = vunpack.c.l.b16 %v538
  %v697 = vunpack.c.h.b16 %v538
  %v698 = vunpack.c.l.b16 %v539
  %v699 = vunpack.c.h.b16 %v539
  %v700 = vpack.c.b16 %v670, %v668
  %v701 = vpack.c.b16 %v671, %v669
  %v702 = vpack.c.b16 %v674, %v672
  %v703 = vpack.c.b16 %v675, %v673
  %v704 = vpack.c.b16 %v678, %v676
  %v705 = vpack.c.b16 %v679, %v677
  %v706 = vpack.c.b16 %v682, %v680
  %v707 = vpack.c.b16 %v683, %v681
  %v708 = vpack.c.b16 %v686, %v684
  %v709 = vpack.c.b16 %v687, %v685
  %v710 = vpack.c.b16 %v690, %v688
  %v711 = vpack.c.b16 %v691, %v689
  %v712 = vpack.c.b16 %v694, %v692
  %v713 = vpack.c.b16 %v695, %v693
  %v714 = vpack.c.b16 %v698, %v696
  %v715 = vpack.c.b16 %v699, %v697
  %732 = vmatpush.bf16.msra.mxu0 %v547
  %733 = vmatpush.bf16.msra.mxu0 %v546
  %734 = vmatpush.bf16.msra.mxu0 %v545
  %735 = vmatpush.bf16.msra.mxu0 %v544
  %736 = vmatpush.bf16.msra.mxu0 %v543
  %737 = vmatpush.bf16.msra.mxu0 %v542
  %738 = vmatpush.bf16.msra.mxu0 %v541
  %739 = vmatpush.bf16.msra.mxu0 %v540
  %740 = vmatmul.bf16.gmra.mxu0 %v700
  %v741 = vpop.f32.mrf.mxu0
  %v742 = vadd.f32 %v575, %v741
  %v743 = vpop.f32.mrf.mxu0
  %v744 = vadd.f32 %v580, %v743
  %745 = vmatmul.bf16.gmra.mxu0 %v702
  %v746 = vpop.f32.mrf.mxu0
  %v747 = vadd.f32 %v585, %v746
  %v748 = vpop.f32.mrf.mxu0
  %v749 = vadd.f32 %v590, %v748
  %750 = vmatmul.bf16.gmra.mxu0 %v704
  %v751 = vpop.f32.mrf.mxu0
  %v752 = vadd.f32 %v595, %v751
  %v753 = vpop.f32.mrf.mxu0
  %v754 = vadd.f32 %v600, %v753
  %755 = vmatmul.bf16.gmra.mxu0 %v706
  %v756 = vpop.f32.mrf.mxu0
  %v757 = vadd.f32 %v605, %v756
  %v758 = vpop.f32.mrf.mxu0
  %v759 = vadd.f32 %v610, %v758
  %760 = vmatmul.bf16.gmra.mxu0 %v708
  %v761 = vpop.f32.mrf.mxu0
  %v762 = vadd.f32 %v615, %v761
  %v763 = vpop.f32.mrf.mxu0
  %v764 = vadd.f32 %v620, %v763
  %765 = vmatmul.bf16.gmra.mxu0 %v710
  %v766 = vpop.f32.mrf.mxu0
  %v767 = vadd.f32 %v625, %v766
  %v768 = vpop.f32.mrf.mxu0
  %v769 = vadd.f32 %v630, %v768
  %770 = vmatmul.bf16.gmra.mxu0 %v712
  %v771 = vpop.f32.mrf.mxu0
  %v772 = vadd.f32 %v635, %v771
  %v773 = vpop.f32.mrf.mxu0
  %v774 = vadd.f32 %v640, %v773
  %775 = vmatmul.bf16.gmra.mxu0 %v714
  %v776 = vpop.f32.mrf.mxu0
  %v777 = vadd.f32 %v645, %v776
  %v778 = vpop.f32.mrf.mxu0
  %v779 = vadd.f32 %v650, %v778
  %780 = vdwg.mxu0
  %781 = vmatpush.bf16.msra.mxu0 %v555
  %782 = vmatpush.bf16.msra.mxu0 %v554
  %783 = vmatpush.bf16.msra.mxu0 %v553
  %784 = vmatpush.bf16.msra.mxu0 %v552
  %785 = vmatpush.bf16.msra.mxu0 %v551
  %786 = vmatpush.bf16.msra.mxu0 %v550
  %787 = vmatpush.bf16.msra.mxu0 %v549
  %788 = vmatpush.bf16.msra.mxu0 %v548
  %789 = vmatmul.bf16.gmra.mxu0 %v701
  %v790 = vpop.f32.mrf.mxu0
  %v791 = vadd.f32 %v742, %v790
  %v792 = vpop.f32.mrf.mxu0
  %v793 = vadd.f32 %v744, %v792
  %794 = vmatmul.bf16.gmra.mxu0 %v703
  %v795 = vpop.f32.mrf.mxu0
  %v796 = vadd.f32 %v747, %v795
  %v797 = vpop.f32.mrf.mxu0
  %v798 = vadd.f32 %v749, %v797
  %799 = vmatmul.bf16.gmra.mxu0 %v705
  %v800 = vpop.f32.mrf.mxu0
  %v801 = vadd.f32 %v752, %v800
  %v802 = vpop.f32.mrf.mxu0
  %v803 = vadd.f32 %v754, %v802
  %804 = vmatmul.bf16.gmra.mxu0 %v707
  %v805 = vpop.f32.mrf.mxu0
  %v806 = vadd.f32 %v757, %v805
  %v807 = vpop.f32.mrf.mxu0
  %v808 = vadd.f32 %v759, %v807
  %809 = vmatmul.bf16.gmra.mxu0 %v709
  %v810 = vpop.f32.mrf.mxu0
  %v811 = vadd.f32 %v762, %v810
  %v812 = vpop.f32.mrf.mxu0
  %v813 = vadd.f32 %v764, %v812
  %814 = vmatmul.bf16.gmra.mxu0 %v711
  %v815 = vpop.f32.mrf.mxu0
  %v816 = vadd.f32 %v767, %v815
  %v817 = vpop.f32.mrf.mxu0
  %v818 = vadd.f32 %v769, %v817
  %819 = vmatmul.bf16.gmra.mxu0 %v713
  %v820 = vpop.f32.mrf.mxu0
  %v821 = vadd.f32 %v772, %v820
  %v822 = vpop.f32.mrf.mxu0
  %v823 = vadd.f32 %v774, %v822
  %824 = vmatmul.bf16.gmra.mxu0 %v715
  %v825 = vpop.f32.mrf.mxu0
  %v826 = vadd.f32 %v777, %v825
  %v827 = vpop.f32.mrf.mxu0
  %v828 = vadd.f32 %v779, %v827
  %829 = vdwg.mxu0
  %v830 = vmax.f32 %v791, 0.0
  %v831 = vmax.f32 %v793, 0.0
  %v832 = vmax.f32 %v796, 0.0
  %v833 = vmax.f32 %v798, 0.0
  %v834 = vmax.f32 %v801, 0.0
  %v835 = vmax.f32 %v803, 0.0
  %v836 = vmax.f32 %v806, 0.0
  %v837 = vmax.f32 %v808, 0.0
  %v838 = vmax.f32 %v811, 0.0
  %v839 = vmax.f32 %v813, 0.0
  %v840 = vmax.f32 %v816, 0.0
  %v841 = vmax.f32 %v818, 0.0
  %v842 = vmax.f32 %v821, 0.0
  %v843 = vmax.f32 %v823, 0.0
  %v844 = vmax.f32 %v826, 0.0
  %v845 = vmax.f32 %v828, 0.0
  %v846 = vld [vmem:[%s5] sm:$0xf]
  %v847 = vld [vmem:[%s5 + $0x4] sm:$0xf]
  %v848 = vld [vmem:[%s5 + $0x8] sm:$0xf]
  %v849 = vld [vmem:[%s5 + $0xc] sm:$0xf]
  %v850 = vld [vmem:[%s5 + $0x10] sm:$0xf]
  %v851 = vld [vmem:[%s5 + $0x14] sm:$0xf]
  %v852 = vld [vmem:[%s5 + $0x18] sm:$0xf]
  %v853 = vld [vmem:[%s5 + $0x1c] sm:$0xf]
  %v854 = vld [vmem:[%s5 + $0x20] sm:$0xf]
  %v855 = vld [vmem:[%s5 + $0x24] sm:$0xf]
  %v856 = vld [vmem:[%s5 + $0x28] sm:$0xf]
  %v857 = vld [vmem:[%s5 + $0x2c] sm:$0xf]
  %v858 = vld [vmem:[%s5 + $0x30] sm:$0xf]
  %v859 = vld [vmem:[%s5 + $0x34] sm:$0xf]
  %v860 = vld [vmem:[%s5 + $0x38] sm:$0xf]
  %v861 = vld [vmem:[%s5 + $0x3c] sm:$0xf]
  %v862 = vpack.c.bf16 %v831, %v830
  %v863 = vpack.c.bf16 %v833, %v832
  %v864 = vpack.c.bf16 %v835, %v834
  %v865 = vpack.c.bf16 %v837, %v836
  %v866 = vpack.c.bf16 %v839, %v838
  %v867 = vpack.c.bf16 %v841, %v840
  %v868 = vpack.c.bf16 %v843, %v842
  %v869 = vpack.c.bf16 %v845, %v844
  %v870 = vld [vmem:[%s6] sm:$0xff]
  %v871 = vld [vmem:[%s6 + $0x8] sm:$0xff]
  %v872 = vld [vmem:[%s6 + $0x10] sm:$0xff]
  %v873 = vld [vmem:[%s6 + $0x18] sm:$0xff]
  %v874 = vld [vmem:[%s6 + $0x20] sm:$0xff]
  %v875 = vld [vmem:[%s6 + $0x28] sm:$0xff]
  %v876 = vld [vmem:[%s6 + $0x30] sm:$0xff]
  %v877 = vld [vmem:[%s6 + $0x38] sm:$0xff]
  %v878 = vld [vmem:[%s6 + $0x40] sm:$0xff]
  %v879 = vld [vmem:[%s6 + $0x48] sm:$0xff]
  %v880 = vld [vmem:[%s6 + $0x50] sm:$0xff]
  %v881 = vld [vmem:[%s6 + $0x58] sm:$0xff]
  %v882 = vld [vmem:[%s6 + $0x60] sm:$0xff]
  %v883 = vld [vmem:[%s6 + $0x68] sm:$0xff]
  %v884 = vld [vmem:[%s6 + $0x70] sm:$0xff]
  %v885 = vld [vmem:[%s6 + $0x78] sm:$0xff]
  %887 = vset.pattern.permute.xlu0 0
  %888 = vperm.xlu0 %887, %v870
  %v889 = vpop.permute.xlu0 %888
  %892 = vset.pattern.permute.xlu0 0
  %893 = vperm.xlu0 %892, %v871
  %v894 = vpop.permute.xlu0 %893
  %897 = vset.pattern.permute.xlu0 0
  %898 = vperm.xlu0 %897, %v872
  %v899 = vpop.permute.xlu0 %898
  %902 = vset.pattern.permute.xlu0 0
  %903 = vperm.xlu0 %902, %v873
  %v904 = vpop.permute.xlu0 %903
  %907 = vset.pattern.permute.xlu0 0
  %908 = vperm.xlu0 %907, %v874
  %v909 = vpop.permute.xlu0 %908
  %912 = vset.pattern.permute.xlu0 0
  %913 = vperm.xlu0 %912, %v875
  %v914 = vpop.permute.xlu0 %913
  %917 = vset.pattern.permute.xlu0 0
  %918 = vperm.xlu0 %917, %v876
  %v919 = vpop.permute.xlu0 %918
  %922 = vset.pattern.permute.xlu0 0
  %923 = vperm.xlu0 %922, %v877
  %v924 = vpop.permute.xlu0 %923
  %927 = vset.pattern.permute.xlu0 0
  %928 = vperm.xlu0 %927, %v878
  %v929 = vpop.permute.xlu0 %928
  %932 = vset.pattern.permute.xlu0 0
  %933 = vperm.xlu0 %932, %v879
  %v934 = vpop.permute.xlu0 %933
  %937 = vset.pattern.permute.xlu0 0
  %938 = vperm.xlu0 %937, %v880
  %v939 = vpop.permute.xlu0 %938
  %942 = vset.pattern.permute.xlu0 0
  %943 = vperm.xlu0 %942, %v881
  %v944 = vpop.permute.xlu0 %943
  %947 = vset.pattern.permute.xlu0 0
  %948 = vperm.xlu0 %947, %v882
  %v949 = vpop.permute.xlu0 %948
  %952 = vset.pattern.permute.xlu0 0
  %953 = vperm.xlu0 %952, %v883
  %v954 = vpop.permute.xlu0 %953
  %957 = vset.pattern.permute.xlu0 0
  %958 = vperm.xlu0 %957, %v884
  %v959 = vpop.permute.xlu0 %958
  %962 = vset.pattern.permute.xlu0 0
  %963 = vperm.xlu0 %962, %v885
  %v964 = vpop.permute.xlu0 %963
  %v982 = vunpack.c.l.b16 %v846
  %v983 = vunpack.c.l.b16 %v847
  %v984 = vunpack.c.l.b16 %v848
  %v985 = vunpack.c.l.b16 %v849
  %v986 = vunpack.c.l.b16 %v850
  %v987 = vunpack.c.l.b16 %v851
  %v988 = vunpack.c.l.b16 %v852
  %v989 = vunpack.c.l.b16 %v853
  %v990 = vunpack.c.l.b16 %v854
  %v991 = vunpack.c.l.b16 %v855
  %v992 = vunpack.c.l.b16 %v856
  %v993 = vunpack.c.l.b16 %v857
  %v994 = vunpack.c.l.b16 %v858
  %v995 = vunpack.c.l.b16 %v859
  %v996 = vunpack.c.l.b16 %v860
  %v997 = vunpack.c.l.b16 %v861
  %v998 = vpack.c.b16 %v983, %v982
  %v999 = vpack.c.b16 %v985, %v984
  %v1000 = vpack.c.b16 %v987, %v986
  %v1001 = vpack.c.b16 %v989, %v988
  %v1002 = vpack.c.b16 %v991, %v990
  %v1003 = vpack.c.b16 %v993, %v992
  %v1004 = vpack.c.b16 %v995, %v994
  %v1005 = vpack.c.b16 %v997, %v996
  %1014 = vmatpush.bf16.msra.mxu0 %v869
  %1015 = vmatpush.bf16.msra.mxu0 %v868
  %1016 = vmatpush.bf16.msra.mxu0 %v867
  %1017 = vmatpush.bf16.msra.mxu0 %v866
  %1018 = vmatpush.bf16.msra.mxu0 %v865
  %1019 = vmatpush.bf16.msra.mxu0 %v864
  %1020 = vmatpush.bf16.msra.mxu0 %v863
  %1021 = vmatpush.bf16.msra.mxu0 %v862
  %1022 = vmatmul.bf16.gmra.mxu0 %v998
  %v1023 = vpop.f32.mrf.mxu0
  %v1024 = vadd.f32 %v889, %v1023
  %v1025 = vpop.f32.mrf.mxu0
  %v1026 = vadd.f32 %v894, %v1025
  %1027 = vmatmul.bf16.gmra.mxu0 %v999
  %v1028 = vpop.f32.mrf.mxu0
  %v1029 = vadd.f32 %v899, %v1028
  %v1030 = vpop.f32.mrf.mxu0
  %v1031 = vadd.f32 %v904, %v1030
  %1032 = vmatmul.bf16.gmra.mxu0 %v1000
  %v1033 = vpop.f32.mrf.mxu0
  %v1034 = vadd.f32 %v909, %v1033
  %v1035 = vpop.f32.mrf.mxu0
  %v1036 = vadd.f32 %v914, %v1035
  %1037 = vmatmul.bf16.gmra.mxu0 %v1001
  %v1038 = vpop.f32.mrf.mxu0
  %v1039 = vadd.f32 %v919, %v1038
  %v1040 = vpop.f32.mrf.mxu0
  %v1041 = vadd.f32 %v924, %v1040
  %1042 = vmatmul.bf16.gmra.mxu0 %v1002
  %v1043 = vpop.f32.mrf.mxu0
  %v1044 = vadd.f32 %v929, %v1043
  %v1045 = vpop.f32.mrf.mxu0
  %v1046 = vadd.f32 %v934, %v1045
  %1047 = vmatmul.bf16.gmra.mxu0 %v1003
  %v1048 = vpop.f32.mrf.mxu0
  %v1049 = vadd.f32 %v939, %v1048
  %v1050 = vpop.f32.mrf.mxu0
  %v1051 = vadd.f32 %v944, %v1050
  %1052 = vmatmul.bf16.gmra.mxu0 %v1004
  %v1053 = vpop.f32.mrf.mxu0
  %v1054 = vadd.f32 %v949, %v1053
  %v1055 = vpop.f32.mrf.mxu0
  %v1056 = vadd.f32 %v954, %v1055
  %1057 = vmatmul.bf16.gmra.mxu0 %v1005
  %v1058 = vpop.f32.mrf.mxu0
  %v1059 = vadd.f32 %v959, %v1058
  %v1060 = vpop.f32.mrf.mxu0
  %v1061 = vadd.f32 %v964, %v1060
  %1062 = vdwg.mxu0
  %v1063 = vmax.f32 %v1024, 0.0
  %v1064 = vmax.f32 %v1026, 0.0
  %v1065 = vmax.f32 %v1029, 0.0
  %v1066 = vmax.f32 %v1031, 0.0
  %v1067 = vmax.f32 %v1034, 0.0
  %v1068 = vmax.f32 %v1036, 0.0
  %v1069 = vmax.f32 %v1039, 0.0
  %v1070 = vmax.f32 %v1041, 0.0
  %v1071 = vmax.f32 %v1044, 0.0
  %v1072 = vmax.f32 %v1046, 0.0
  %v1073 = vmax.f32 %v1049, 0.0
  %v1074 = vmax.f32 %v1051, 0.0
  %v1075 = vmax.f32 %v1054, 0.0
  %v1076 = vmax.f32 %v1056, 0.0
  %v1077 = vmax.f32 %v1059, 0.0
  %v1078 = vmax.f32 %v1061, 0.0
  %v1079 = vld [vmem:[%s7] sm:$0xf]
  %v1080 = vld [vmem:[%s7 + $0x4] sm:$0xf]
  %v1081 = vld [vmem:[%s7 + $0x8] sm:$0xf]
  %v1082 = vld [vmem:[%s7 + $0xc] sm:$0xf]
  %v1083 = vld [vmem:[%s7 + $0x10] sm:$0xf]
  %v1084 = vld [vmem:[%s7 + $0x14] sm:$0xf]
  %v1085 = vld [vmem:[%s7 + $0x18] sm:$0xf]
  %v1086 = vld [vmem:[%s7 + $0x1c] sm:$0xf]
  %v1087 = vld [vmem:[%s7 + $0x20] sm:$0xf]
  %v1088 = vld [vmem:[%s7 + $0x24] sm:$0xf]
  %v1089 = vld [vmem:[%s7 + $0x28] sm:$0xf]
  %v1090 = vld [vmem:[%s7 + $0x2c] sm:$0xf]
  %v1091 = vld [vmem:[%s7 + $0x30] sm:$0xf]
  %v1092 = vld [vmem:[%s7 + $0x34] sm:$0xf]
  %v1093 = vld [vmem:[%s7 + $0x38] sm:$0xf]
  %v1094 = vld [vmem:[%s7 + $0x3c] sm:$0xf]
  %v1095 = vpack.c.bf16 %v1064, %v1063
  %v1096 = vpack.c.bf16 %v1066, %v1065
  %v1097 = vpack.c.bf16 %v1068, %v1067
  %v1098 = vpack.c.bf16 %v1070, %v1069
  %v1099 = vpack.c.bf16 %v1072, %v1071
  %v1100 = vpack.c.bf16 %v1074, %v1073
  %v1101 = vpack.c.bf16 %v1076, %v1075
  %v1102 = vpack.c.bf16 %v1078, %v1077
  %v1103 = vld [vmem:[%s8] sm:$0xff]
  %v1104 = vld [vmem:[%s8 + $0x8] sm:$0xff]
  %v1105 = vld [vmem:[%s8 + $0x10] sm:$0xff]
  %v1106 = vld [vmem:[%s8 + $0x18] sm:$0xff]
  %v1107 = vld [vmem:[%s8 + $0x20] sm:$0xff]
  %v1108 = vld [vmem:[%s8 + $0x28] sm:$0xff]
  %v1109 = vld [vmem:[%s8 + $0x30] sm:$0xff]
  %v1110 = vld [vmem:[%s8 + $0x38] sm:$0xff]
  %v1111 = vld [vmem:[%s8 + $0x40] sm:$0xff]
  %v1112 = vld [vmem:[%s8 + $0x48] sm:$0xff]
  %v1113 = vld [vmem:[%s8 + $0x50] sm:$0xff]
  %v1114 = vld [vmem:[%s8 + $0x58] sm:$0xff]
  %v1115 = vld [vmem:[%s8 + $0x60] sm:$0xff]
  %v1116 = vld [vmem:[%s8 + $0x68] sm:$0xff]
  %v1117 = vld [vmem:[%s8 + $0x70] sm:$0xff]
  %v1118 = vld [vmem:[%s8 + $0x78] sm:$0xff]
  %1120 = vset.pattern.permute.xlu0 0
  %1121 = vperm.xlu0 %1120, %v1103
  %v1122 = vpop.permute.xlu0 %1121
  %1125 = vset.pattern.permute.xlu0 0
  %1126 = vperm.xlu0 %1125, %v1104
  %v1127 = vpop.permute.xlu0 %1126
  %1130 = vset.pattern.permute.xlu0 0
  %1131 = vperm.xlu0 %1130, %v1105
  %v1132 = vpop.permute.xlu0 %1131
  %1135 = vset.pattern.permute.xlu0 0
  %1136 = vperm.xlu0 %1135, %v1106
  %v1137 = vpop.permute.xlu0 %1136
  %1140 = vset.pattern.permute.xlu0 0
  %1141 = vperm.xlu0 %1140, %v1107
  %v1142 = vpop.permute.xlu0 %1141
  %1145 = vset.pattern.permute.xlu0 0
  %1146 = vperm.xlu0 %1145, %v1108
  %v1147 = vpop.permute.xlu0 %1146
  %1150 = vset.pattern.permute.xlu0 0
  %1151 = vperm.xlu0 %1150, %v1109
  %v1152 = vpop.permute.xlu0 %1151
  %1155 = vset.pattern.permute.xlu0 0
  %1156 = vperm.xlu0 %1155, %v1110
  %v1157 = vpop.permute.xlu0 %1156
  %1160 = vset.pattern.permute.xlu0 0
  %1161 = vperm.xlu0 %1160, %v1111
  %v1162 = vpop.permute.xlu0 %1161
  %1165 = vset.pattern.permute.xlu0 0
  %1166 = vperm.xlu0 %1165, %v1112
  %v1167 = vpop.permute.xlu0 %1166
  %1170 = vset.pattern.permute.xlu0 0
  %1171 = vperm.xlu0 %1170, %v1113
  %v1172 = vpop.permute.xlu0 %1171
  %1175 = vset.pattern.permute.xlu0 0
  %1176 = vperm.xlu0 %1175, %v1114
  %v1177 = vpop.permute.xlu0 %1176
  %1180 = vset.pattern.permute.xlu0 0
  %1181 = vperm.xlu0 %1180, %v1115
  %v1182 = vpop.permute.xlu0 %1181
  %1185 = vset.pattern.permute.xlu0 0
  %1186 = vperm.xlu0 %1185, %v1116
  %v1187 = vpop.permute.xlu0 %1186
  %1190 = vset.pattern.permute.xlu0 0
  %1191 = vperm.xlu0 %1190, %v1117
  %v1192 = vpop.permute.xlu0 %1191
  %1195 = vset.pattern.permute.xlu0 0
  %1196 = vperm.xlu0 %1195, %v1118
  %v1197 = vpop.permute.xlu0 %1196
  %v1215 = vunpack.c.l.b16 %v1079
  %v1216 = vunpack.c.l.b16 %v1080
  %v1217 = vunpack.c.l.b16 %v1081
  %v1218 = vunpack.c.l.b16 %v1082
  %v1219 = vunpack.c.l.b16 %v1083
  %v1220 = vunpack.c.l.b16 %v1084
  %v1221 = vunpack.c.l.b16 %v1085
  %v1222 = vunpack.c.l.b16 %v1086
  %v1223 = vunpack.c.l.b16 %v1087
  %v1224 = vunpack.c.l.b16 %v1088
  %v1225 = vunpack.c.l.b16 %v1089
  %v1226 = vunpack.c.l.b16 %v1090
  %v1227 = vunpack.c.l.b16 %v1091
  %v1228 = vunpack.c.l.b16 %v1092
  %v1229 = vunpack.c.l.b16 %v1093
  %v1230 = vunpack.c.l.b16 %v1094
  %v1231 = vpack.c.b16 %v1216, %v1215
  %v1232 = vpack.c.b16 %v1218, %v1217
  %v1233 = vpack.c.b16 %v1220, %v1219
  %v1234 = vpack.c.b16 %v1222, %v1221
  %v1235 = vpack.c.b16 %v1224, %v1223
  %v1236 = vpack.c.b16 %v1226, %v1225
  %v1237 = vpack.c.b16 %v1228, %v1227
  %v1238 = vpack.c.b16 %v1230, %v1229
  %1247 = vmatpush.bf16.msra.mxu0 %v1102
  %1248 = vmatpush.bf16.msra.mxu0 %v1101
  %1249 = vmatpush.bf16.msra.mxu0 %v1100
  %1250 = vmatpush.bf16.msra.mxu0 %v1099
  %1251 = vmatpush.bf16.msra.mxu0 %v1098
  %1252 = vmatpush.bf16.msra.mxu0 %v1097
  %1253 = vmatpush.bf16.msra.mxu0 %v1096
  %1254 = vmatpush.bf16.msra.mxu0 %v1095
  %1255 = vmatmul.bf16.gmra.mxu0 %v1231
  %v1256 = vpop.f32.mrf.mxu0
  %v1257 = vadd.f32 %v1122, %v1256
  %v1258 = vpop.f32.mrf.mxu0
  %v1259 = vadd.f32 %v1127, %v1258
  %1260 = vmatmul.bf16.gmra.mxu0 %v1232
  %v1261 = vpop.f32.mrf.mxu0
  %v1262 = vadd.f32 %v1132, %v1261
  %v1263 = vpop.f32.mrf.mxu0
  %v1264 = vadd.f32 %v1137, %v1263
  %1265 = vmatmul.bf16.gmra.mxu0 %v1233
  %v1266 = vpop.f32.mrf.mxu0
  %v1267 = vadd.f32 %v1142, %v1266
  %v1268 = vpop.f32.mrf.mxu0
  %v1269 = vadd.f32 %v1147, %v1268
  %1270 = vmatmul.bf16.gmra.mxu0 %v1234
  %v1271 = vpop.f32.mrf.mxu0
  %v1272 = vadd.f32 %v1152, %v1271
  %v1273 = vpop.f32.mrf.mxu0
  %v1274 = vadd.f32 %v1157, %v1273
  %1275 = vmatmul.bf16.gmra.mxu0 %v1235
  %v1276 = vpop.f32.mrf.mxu0
  %v1277 = vadd.f32 %v1162, %v1276
  %v1278 = vpop.f32.mrf.mxu0
  %v1279 = vadd.f32 %v1167, %v1278
  %1280 = vmatmul.bf16.gmra.mxu0 %v1236
  %v1281 = vpop.f32.mrf.mxu0
  %v1282 = vadd.f32 %v1172, %v1281
  %v1283 = vpop.f32.mrf.mxu0
  %v1284 = vadd.f32 %v1177, %v1283
  %1285 = vmatmul.bf16.gmra.mxu0 %v1237
  %v1286 = vpop.f32.mrf.mxu0
  %v1287 = vadd.f32 %v1182, %v1286
  %v1288 = vpop.f32.mrf.mxu0
  %v1289 = vadd.f32 %v1187, %v1288
  %1290 = vmatmul.bf16.gmra.mxu0 %v1238
  %v1291 = vpop.f32.mrf.mxu0
  %v1292 = vadd.f32 %v1192, %v1291
  %v1293 = vpop.f32.mrf.mxu0
  %v1294 = vadd.f32 %v1197, %v1293
  %1295 = vdwg.mxu0
  %v1296 = vmax.f32 %v1257, 0.0
  %v1297 = vmax.f32 %v1259, 0.0
  %v1298 = vmax.f32 %v1262, 0.0
  %v1299 = vmax.f32 %v1264, 0.0
  %v1300 = vmax.f32 %v1267, 0.0
  %v1301 = vmax.f32 %v1269, 0.0
  %v1302 = vmax.f32 %v1272, 0.0
  %v1303 = vmax.f32 %v1274, 0.0
  %v1304 = vmax.f32 %v1277, 0.0
  %v1305 = vmax.f32 %v1279, 0.0
  %v1306 = vmax.f32 %v1282, 0.0
  %v1307 = vmax.f32 %v1284, 0.0
  %v1308 = vmax.f32 %v1287, 0.0
  %v1309 = vmax.f32 %v1289, 0.0
  %v1310 = vmax.f32 %v1292, 0.0
  %v1311 = vmax.f32 %v1294, 0.0
  %v1312 = vld [vmem:[%s9] sm:$0xff]
  %v1313 = vld [vmem:[%s9 + $0x8] sm:$0xff]
  %v1314 = vld [vmem:[%s9 + $0x10] sm:$0xff]
  %v1315 = vld [vmem:[%s9 + $0x18] sm:$0xff]
  %v1316 = vld [vmem:[%s9 + $0x20] sm:$0xff]
  %v1317 = vld [vmem:[%s9 + $0x28] sm:$0xff]
  %v1318 = vld [vmem:[%s9 + $0x30] sm:$0xff]
  %v1319 = vld [vmem:[%s9 + $0x38] sm:$0xff]
  %v1320 = vld [vmem:[%s9 + $0x40] sm:$0xff]
  %v1321 = vld [vmem:[%s9 + $0x48] sm:$0xff]
  %v1322 = vld [vmem:[%s9 + $0x50] sm:$0xff]
  %v1323 = vld [vmem:[%s9 + $0x58] sm:$0xff]
  %v1324 = vld [vmem:[%s9 + $0x60] sm:$0xff]
  %v1325 = vld [vmem:[%s9 + $0x68] sm:$0xff]
  %v1326 = vld [vmem:[%s9 + $0x70] sm:$0xff]
  %v1327 = vld [vmem:[%s9 + $0x78] sm:$0xff]
  %1329 = vset.pattern.permute.xlu0 0
  %1330 = vperm.xlu0 %1329, %v1312
  %v1331 = vpop.permute.xlu0 %1330
  %1334 = vset.pattern.permute.xlu0 0
  %1335 = vperm.xlu0 %1334, %v1313
  %v1336 = vpop.permute.xlu0 %1335
  %1339 = vset.pattern.permute.xlu0 0
  %1340 = vperm.xlu0 %1339, %v1314
  %v1341 = vpop.permute.xlu0 %1340
  %1344 = vset.pattern.permute.xlu0 0
  %1345 = vperm.xlu0 %1344, %v1315
  %v1346 = vpop.permute.xlu0 %1345
  %1349 = vset.pattern.permute.xlu0 0
  %1350 = vperm.xlu0 %1349, %v1316
  %v1351 = vpop.permute.xlu0 %1350
  %1354 = vset.pattern.permute.xlu0 0
  %1355 = vperm.xlu0 %1354, %v1317
  %v1356 = vpop.permute.xlu0 %1355
  %1359 = vset.pattern.permute.xlu0 0
  %1360 = vperm.xlu0 %1359, %v1318
  %v1361 = vpop.permute.xlu0 %1360
  %1364 = vset.pattern.permute.xlu0 0
  %1365 = vperm.xlu0 %1364, %v1319
  %v1366 = vpop.permute.xlu0 %1365
  %1369 = vset.pattern.permute.xlu0 0
  %1370 = vperm.xlu0 %1369, %v1320
  %v1371 = vpop.permute.xlu0 %1370
  %1374 = vset.pattern.permute.xlu0 0
  %1375 = vperm.xlu0 %1374, %v1321
  %v1376 = vpop.permute.xlu0 %1375
  %1379 = vset.pattern.permute.xlu0 0
  %1380 = vperm.xlu0 %1379, %v1322
  %v1381 = vpop.permute.xlu0 %1380
  %1384 = vset.pattern.permute.xlu0 0
  %1385 = vperm.xlu0 %1384, %v1323
  %v1386 = vpop.permute.xlu0 %1385
  %1389 = vset.pattern.permute.xlu0 0
  %1390 = vperm.xlu0 %1389, %v1324
  %v1391 = vpop.permute.xlu0 %1390
  %1394 = vset.pattern.permute.xlu0 0
  %1395 = vperm.xlu0 %1394, %v1325
  %v1396 = vpop.permute.xlu0 %1395
  %1399 = vset.pattern.permute.xlu0 0
  %1400 = vperm.xlu0 %1399, %v1326
  %v1401 = vpop.permute.xlu0 %1400
  %1404 = vset.pattern.permute.xlu0 0
  %1405 = vperm.xlu0 %1404, %v1327
  %v1406 = vpop.permute.xlu0 %1405
  %v1408 = vmul.f32 %v1331, %v1296
  %v1409 = vmul.f32 %v1336, %v1297
  %v1410 = vmul.f32 %v1341, %v1298
  %v1411 = vmul.f32 %v1346, %v1299
  %v1412 = vmul.f32 %v1351, %v1300
  %v1413 = vmul.f32 %v1356, %v1301
  %v1414 = vmul.f32 %v1361, %v1302
  %v1415 = vmul.f32 %v1366, %v1303
  %v1416 = vmul.f32 %v1371, %v1304
  %v1417 = vmul.f32 %v1376, %v1305
  %v1418 = vmul.f32 %v1381, %v1306
  %v1419 = vmul.f32 %v1386, %v1307
  %v1420 = vmul.f32 %v1391, %v1308
  %v1421 = vmul.f32 %v1396, %v1309
  %v1422 = vmul.f32 %v1401, %v1310
  %v1423 = vmul.f32 %v1406, %v1311
  %v1424 = vadd.f32 %v1408, %v1409
  %v1425 = vadd.f32 %v1424, %v1410
  %v1426 = vadd.f32 %v1425, %v1411
  %v1427 = vadd.f32 %v1426, %v1412
  %v1428 = vadd.f32 %v1427, %v1413
  %v1429 = vadd.f32 %v1428, %v1414
  %v1430 = vadd.f32 %v1429, %v1415
  %v1431 = vadd.f32 %v1430, %v1416
  %v1432 = vadd.f32 %v1431, %v1417
  %v1433 = vadd.f32 %v1432, %v1418
  %v1434 = vadd.f32 %v1433, %v1419
  %v1435 = vadd.f32 %v1434, %v1420
  %v1436 = vadd.f32 %v1435, %v1421
  %v1437 = vadd.f32 %v1436, %v1422
  %v1438 = vadd.f32 %v1437, %v1423
  %v1439 = vrot.slane %v1438, 4
  %v1440 = vadd.f32 %v1438, %v1439
  %v1441 = vrot.slane %v1440, 2
  %v1442 = vadd.f32 %v1440, %v1441
  %v1443 = vrot.slane %v1442, 1
  %v1444 = vadd.f32 %v1442, %v1443
  %v1445 = vld [vmem:[#allocation2] sm:$0x1]
  %1447 = vset.pattern.permute.xlu0 0
  %1448 = vperm.xlu0 %1447, %v1445
  %v1449 = vpop.permute.xlu0 %1448
  %v1451 = vperm.slane %v1449, 0
  %v1452 = vadd.f32 %v1444, %v1451
  %1453 = vst [vmem:[%s11] sm:$0x1] %v1452
  // Predicated region
  $region46: #{simple_model_forward.1} parent=0 // pred_check
    _
  $region47: #{simple_model_forward.1} parent=0 // pred_check_branch
    %1455 = sbr.rel (0) target = $region49
  $region48: #{simple_model_forward.1} parent=0 // pred_region
    _
  $region49: #{simple_model_forward.1} parent=0 // pred_fallthru
    _
  // Predicated region
  $region50: #{simple_model_forward.1} parent=0 // pred_check
    _
  $region51: #{simple_model_forward.1} parent=0 // pred_check_branch
    %1457 = sbr.rel (0) target = $region53
  $region52: #{simple_model_forward.1} parent=0 // pred_region
    _
  $region53: #{simple_model_forward.1} parent=0 // pred_fallthru
    _

</llo_original>
